<compile_context>
chip_gen: v6e
topology: v6e:2x2x1
jax: 0.10.0
libtpu: 0.0.40
codegen_flags: <defaults>
</compile_context>

<pallas_src>
import functools

import jax
import jax.numpy as jnp
from jax.experimental import pallas as pl
from jax.experimental.pallas import tpu as pltpu


def _layernorm_kernel(x_ref, w_ref, b_ref, o_ref, *, eps):
    """x_ref: (tile_rows, H); w_ref/b_ref: (1, H) float32; o_ref: (tile_rows, H)."""
    h = x_ref.shape[-1]
    x = x_ref[...].astype(jnp.float32)

    # Row reductions on the MXU (idle otherwise) instead of the XLU cross-lane
    # reduce.  Two-pass form matches the PyTorch math exactly.
    ones_col = jnp.ones((h, 1), jnp.float32)
    inv_h = jnp.float32(1.0 / h)
    u = jnp.dot(x, ones_col, preferred_element_type=jnp.float32) * inv_h   # (rows, 1)
    d = x - u                                                              # x dead after this
    s = jnp.dot(d * d, ones_col, preferred_element_type=jnp.float32) * inv_h
    xn = d * jax.lax.rsqrt(s + eps)                                        # eps inside sqrt

    o_ref[...] = (w_ref[...] * xn + b_ref[...]).astype(o_ref.dtype)


def _row_granularity(dtype):
    """Sublane packing granularity: 8 rows (f32), 16 (bf16/f16), 32 (int8/fp8)."""
    itemsize = jnp.dtype(dtype).itemsize
    return 8 * max(1, 4 // max(1, itemsize))


def _round_up(x, m):
    return ((x + m - 1) // m) * m


def _vmem_capacity_bytes():
    try:
        cap = int(pltpu.get_tpu_info().vmem_capacity_bytes)
        if cap > 0:
            return cap
    except Exception:
        pass
    return 64 << 20  # conservative fallback (v7x per-TC)


def layernorm(x, weight, bias, eps=1e-12):
    """LayerNorm over the last axis of x (any leading dims)."""
    orig_shape = x.shape
    hidden = orig_shape[-1]
    rows = 1
    for d in orig_shape[:-1]:
        rows *= d

    x2 = x.reshape(rows, hidden)
    # Grid-invariant params: pre-cast to f32 once in the wrapper.
    w2 = weight.astype(jnp.float32).reshape(1, hidden)
    b2 = bias.astype(jnp.float32).reshape(1, hidden)

    itemsize = jnp.dtype(x.dtype).itemsize
    gran = _row_granularity(x.dtype)

    # --- VMEM budgeting: per row of a block we hold
    #   2x double-buffered input + 2x double-buffered output (HBM dtype)
    #   ~3x f32 temporaries (x_f32, d, transient d*d)
    per_row_bytes = hidden * (4 * itemsize + 3 * 4)
    fixed_bytes = 4 * hidden * 4 + (2 << 20)  # w/b (f32, double-buffered) + headroom

    cap = _vmem_capacity_bytes()
    # Clamp so the tiling stays safe even if the query reports per-chip
    # capacity on a 2-TC part (v7x: 64 MiB per TC).
    budget = max(min(cap, 104 << 20) - (8 << 20), 16 << 20)

    # ~4 MiB of f32 working set per block on 64 MiB parts, up to ~8 MiB when
    # the budget allows (v5e/v6e 128 MiB VMEM, very wide hidden).
    target_f32_block = min(8 << 20, max(4 << 20, budget // 14))

    if rows < 2 * gran:
        # Tiny input: one full-array block (block == array dims is always legal).
        tile_rows = rows
    else:
        target_rows = max(gran, (target_f32_block // (hidden * 4)) // gran * gran)
        max_rows = max(gran, ((budget - fixed_bytes) // per_row_bytes) // gran * gran)
        tile_rows = min(target_rows, max_rows)
        # >= ~8 grid steps when rows allow: v7x shards the "parallel" rows axis
        # across its 2 TensorCores and each core still needs a few steps for
        # the double-buffered DMA pipeline to actually overlap.
        min_steps = min(8, max(1, rows // gran))
        tile_rows = min(tile_rows, max(gran, _round_up(pl.cdiv(rows, min_steps), gran)))
        tile_rows = min(tile_rows, _round_up(rows, gran))

    grid = pl.cdiv(rows, tile_rows)  # ragged last block -> masked writeback

    # Prefer an even step count so neither v7x TensorCore idles on a trailing step.
    if grid > 1 and grid % 2 == 1:
        alt = max(gran, _round_up(pl.cdiv(rows, grid + 1), gran))
        if pl.cdiv(rows, alt) % 2 == 0:
            tile_rows = alt
            grid = pl.cdiv(rows, alt)

    block_hbm = tile_rows * hidden * itemsize
    vmem_need = 4 * block_hbm + 3 * tile_rows * hidden * 4 + fixed_bytes
    # Explicit scoped-VMEM limit = actual need (raises it above the 16 MiB v5e
    # default when required; no blanket 32-48 MiB over-reservation), clamped to
    # the hardware-derived budget.
    vmem_limit = int(max(min(vmem_need, budget), 16 << 20))

    kernel = functools.partial(_layernorm_kernel, eps=eps)

    out = pl.pallas_call(
        kernel,
        out_shape=jax.ShapeDtypeStruct((rows, hidden), x.dtype),
        grid_spec=pltpu.PrefetchScalarGridSpec(
            num_scalar_prefetch=0,
            grid=(grid,),
            in_specs=[
                pl.BlockSpec((tile_rows, hidden), lambda i: (i, 0)),
                pl.BlockSpec((1, hidden), lambda i: (0, 0)),
                pl.BlockSpec((1, hidden), lambda i: (0, 0)),
            ],
            out_specs=pl.BlockSpec((tile_rows, hidden), lambda i: (i, 0)),
        ),
        compiler_params=pltpu.CompilerParams(
            dimension_semantics=("parallel",),
            vmem_limit_bytes=vmem_limit,
        ),
    )(x2, w2, b2)

    return out.reshape(orig_shape)


if __name__ == "__main__":
    key = jax.random.PRNGKey(0)
    batch, seq, hidden = 2, 8, 32

    x = jax.random.normal(key, (batch, seq, hidden), dtype=jnp.float32)

    # Deterministic parameter init, matching nn.Parameter(torch.ones/zeros).
    weight = jnp.ones((hidden,), dtype=jnp.float32)
    bias = jnp.zeros((hidden,), dtype=jnp.float32)

    y = jax.block_until_ready(layernorm(x, weight, bias, eps=1e-12))

    # Reference check in plain JAX (same math as the PyTorch module).
    u = jnp.mean(x, axis=-1, keepdims=True)
    s = jnp.mean((x - u) ** 2, axis=-1, keepdims=True)
    ref = weight * ((x - u) / jnp.sqrt(s + 1e-12)) + bias
    assert jnp.allclose(y, ref, atol=1e-5, rtol=1e-5), "mismatch vs reference"

    # Also exercise a shape whose rows don't divide the tile (ragged last block).
    x3 = jax.random.normal(jax.random.PRNGKey(1), (3, 5, hidden), dtype=jnp.float32)
    y3 = jax.block_until_ready(layernorm(x3, weight, bias, eps=1e-12))
    u3 = jnp.mean(x3, axis=-1, keepdims=True)
    s3 = jnp.mean((x3 - u3) ** 2, axis=-1, keepdims=True)
    ref3 = weight * ((x3 - u3) / jnp.sqrt(s3 + 1e-12)) + bias
    assert jnp.allclose(y3, ref3, atol=1e-5, rtol=1e-5), "mismatch (ragged rows)"

    print("KERNEL_OK")
</pallas_src>

<mosaic_0001>
module attributes {stable_mosaic.version = 11 : i64} {
  func.func @_layernorm_kernel(%arg0: i32, %arg1: memref<8x32xf32, #tpu.memory_space<vmem>>, %arg2: memref<1x32xf32, #tpu.memory_space<vmem>>, %arg3: memref<1x32xf32, #tpu.memory_space<vmem>>, %arg4: memref<8x32xf32, #tpu.memory_space<vmem>>) attributes {dimension_semantics = [#tpu.dimension_semantics<parallel>], iteration_bounds = array<i64: 2>, scalar_prefetch = 0 : i64, scratch_operands = 0 : i64, tpu.core_type = #tpu.core_type<tc>, window_params = [{transform_indices = @transform_0, window_bounds = array<i64: 8, 32>}, {pipeline_mode = #tpu.pipeline_mode<synchronous>, transform_indices = @transform_1, window_bounds = array<i64: 1, 32>}, {pipeline_mode = #tpu.pipeline_mode<synchronous>, transform_indices = @transform_2, window_bounds = array<i64: 1, 32>}, {transform_indices = @transform_3, window_bounds = array<i64: 8, 32>}]} {
    %c0 = arith.constant 0 : index
    %c0_0 = arith.constant 0 : index
    %0 = vector.load %arg1[%c0, %c0_0] : memref<8x32xf32, #tpu.memory_space<vmem>>, vector<8x32xf32>
    %cst = arith.constant 1.000000e+00 : f32
    %1 = vector.broadcast %cst : f32 to vector<32x1xf32>
    %cst_1 = arith.constant dense<0.000000e+00> : vector<8x1xf32>
    %2 = tpu.matmul %0, %1, %cst_1 {dimension_numbers = #tpu.dot_dimension_numbers<[1], [0], [0], [1], [0, 0, 1, 1], [], []>} : vector<8x32xf32>, vector<32x1xf32>, vector<8x1xf32> -> vector<8x1xf32>
    %cst_2 = arith.constant 3.125000e-02 : f32
    %3 = vector.broadcast %cst_2 : f32 to vector<8x1xf32>
    %4 = arith.mulf %2, %3 : vector<8x1xf32>
    %5 = vector.broadcast %4 : vector<8x1xf32> to vector<8x32xf32>
    %6 = arith.subf %0, %5 : vector<8x32xf32>
    %7 = arith.mulf %6, %6 : vector<8x32xf32>
    %cst_3 = arith.constant dense<0.000000e+00> : vector<8x1xf32>
    %8 = tpu.matmul %7, %1, %cst_3 {dimension_numbers = #tpu.dot_dimension_numbers<[1], [0], [0], [1], [0, 0, 1, 1], [], []>} : vector<8x32xf32>, vector<32x1xf32>, vector<8x1xf32> -> vector<8x1xf32>
    %cst_4 = arith.constant 3.125000e-02 : f32
    %9 = vector.broadcast %cst_4 : f32 to vector<8x1xf32>
    %10 = arith.mulf %8, %9 : vector<8x1xf32>
    %cst_5 = arith.constant 9.99999996E-13 : f32
    %11 = vector.broadcast %cst_5 : f32 to vector<8x1xf32>
    %12 = arith.addf %10, %11 : vector<8x1xf32>
    %13 = math.rsqrt %12 : vector<8x1xf32>
    %14 = vector.broadcast %13 : vector<8x1xf32> to vector<8x32xf32>
    %15 = arith.mulf %6, %14 : vector<8x32xf32>
    %c0_6 = arith.constant 0 : index
    %c0_7 = arith.constant 0 : index
    %16 = vector.load %arg2[%c0_6, %c0_7] : memref<1x32xf32, #tpu.memory_space<vmem>>, vector<1x32xf32>
    %17 = vector.broadcast %16 : vector<1x32xf32> to vector<8x32xf32>
    %18 = arith.mulf %17, %15 : vector<8x32xf32>
    %c0_8 = arith.constant 0 : index
    %c0_9 = arith.constant 0 : index
    %19 = vector.load %arg3[%c0_8, %c0_9] : memref<1x32xf32, #tpu.memory_space<vmem>>, vector<1x32xf32>
    %20 = vector.broadcast %19 : vector<1x32xf32> to vector<8x32xf32>
    %21 = arith.addf %18, %20 : vector<8x32xf32>
    %c0_10 = arith.constant 0 : index
    %c0_11 = arith.constant 0 : index
    %22 = vector.load %arg4[%c0_10, %c0_11] : memref<8x32xf32, #tpu.memory_space<vmem>>, vector<8x32xf32>
    tpu.vector_store %arg4[%c0_10, %c0_11], %21 {strides = array<i32>} : memref<8x32xf32, #tpu.memory_space<vmem>>, vector<8x32xf32>,
    return
  }
  func.func @transform_0(%arg0: i32) -> (i32, i32) {
    %c0_i32 = arith.constant 0 : i32
    %c0_i32_0 = arith.constant 0 : i32
    return %arg0, %c0_i32 : i32, i32
  }
  func.func @transform_1(%arg0: i32) -> (i32, i32) {
    %c0_i32 = arith.constant 0 : i32
    %c0_i32_0 = arith.constant 0 : i32
    %c0_i32_1 = arith.constant 0 : i32
    return %c0_i32, %c0_i32_0 : i32, i32
  }
  func.func @transform_2(%arg0: i32) -> (i32, i32) {
    %c0_i32 = arith.constant 0 : i32
    %c0_i32_0 = arith.constant 0 : i32
    %c0_i32_1 = arith.constant 0 : i32
    return %c0_i32, %c0_i32_0 : i32, i32
  }
  func.func @transform_3(%arg0: i32) -> (i32, i32) {
    %c0_i32 = arith.constant 0 : i32
    %c0_i32_0 = arith.constant 0 : i32
    return %arg0, %c0_i32 : i32, i32
  }
}

</mosaic_0001>

<llo_original>
// kernel: tpu_custom_call.1
$region0: #{tpu_custom_call.1}
  #allocation0 [shape = 'u32[]', space=smem, size = 0x4, offset = 0x4, fixed_abs, tag = 'smem constant byte address 0x4 - core index']
  #allocation1 [shape = 'u32[144,128]{1,0:T(1,128)}', space=vmem, size = 0x12000, scoped, tag = 'internal scratch']
  %s0 = inlined_call_operand.hbm [shape: f32[16,32], index: 0, kind: input, shape index: {}]
  %s1 = inlined_call_operand.vmem [shape: f32[1,32], index: 1, kind: input, shape index: {}]
  %s2 = inlined_call_operand.vmem [shape: f32[1,32], index: 2, kind: input, shape index: {}]
  %s3 = inlined_call_operand.hbm [shape: f32[16,32], index: 3, kind: output, shape index: {}]
  %s4 = sld [smem:[#allocation0]]
  $region49: #{tpu_custom_call.1} parent=0
    _
  %s6 = ssub.s32 1, %s4
  %s7 = scalar_select 0, %s6, %s4
  $region1: #{tpu_custom_call.1} parent=0
    #allocation2 [shape = 'u8[8192]{0}', space=vmem, size = 0x2000, scoped, tag = 'input window, operand 0']
    #allocation3 [shape = 's32[2]{0}', space=sflag, size = 0x8, scoped, tag = 'scoped memory for tpu_custom_call.1']
    #allocation4 [shape = 's32[2]{0}', space=sflag, size = 0x8, scoped, tag = 'scoped memory for tpu_custom_call.1']
    #allocation5 [shape = 'u8[8192]{0}', space=vmem, size = 0x2000, scoped, tag = 'output window, operand 0']
    %8 = vsyncpa [#allocation3], 0
    %s9 = scalar_lea.sflag [#allocation3], 1
    %10 = vsyncpa %s9, 0
    %11 = vsyncpa [#allocation4], 0
    %s12 = scalar_lea.sflag [#allocation4], 1
    %13 = vsyncpa %s12, 0
    loop: start=0, step=1, limit=4
    $region2: #{tpu_custom_call.1} parent=1 // loop_pre_header
      _
    $region3: #{tpu_custom_call.1} parent=1 // loop_header
      %s15 = sphi 0, %s19
      %p16 = scmp.ge.s32.totalorder %s15, 4
      %s25 = sphi 0, %s27
      %s28 = sphi 0, %s25
      %s29 = sphi 0, %s28
      %s45 = sphi 0, %s29
      %s49 = sphi 0, %s49
      %s51 = sphi 0, %s49
      %s52 = sphi 0, %s51
      %s66 = sphi 0, %s52
      %s70 = sphi 0, %s70
      %s72 = sphi 0, %s70
      %s73 = sphi 0, %s72
      %s87 = sphi 0, %s73
      %s93 = sphi 0, %s95
      %s96 = sphi 0, %s93
      %s97 = sphi 0, %s96
      %s113 = sphi 0, %s97
    $region4: #{tpu_custom_call.1} parent=1 // loop_header_branch
      %18 = sbr.rel (%p16) target = $region8
    $region5: #{tpu_custom_call.1} parent=1 // loop_body
      %s20 = ssub.s32 %s15, 1
      %s21 = ssub.s32 %s15, 2
      %s22 = sadd.s32 %s15, 1
      %s23 = ssub.s32 %s15, %s22
      %p24 = scmp.eq.s32.totalorder %s23, 0
      %s26 = sadd.s32 %s25, 1
      %s27 = scalar_select %p24, %s25, %s26
      %p30 = pneg %p24
      %p31 = scmp.eq.s32.totalorder %s15, 1
      %p32 = por %p30, %p31
      %p33 = scmp.ne.s32.totalorder %s25, %s28
      %p34 = scmp.eq.s32.totalorder %s15, 0
      %p35 = por %p33, %p34
      %p36 = scmp.ne.s32.totalorder %s25, %s28
      %p37 = scmp.eq.s32.totalorder %s20, 1
      %p38 = por %p36, %p37
      %p39 = scmp.ne.s32.totalorder %s28, %s29
      %p40 = scmp.eq.s32.totalorder %s20, 0
      %p41 = por %p39, %p40
      %p42 = scmp.ne.s32.totalorder %s28, %s29
      %p43 = scmp.eq.s32.totalorder %s21, 1
      %p44 = por %p42, %p43
      %p46 = scmp.ne.s32.totalorder %s29, %s45
      %p47 = scmp.eq.s32.totalorder %s21, 0
      %p48 = por %p46, %p47
      %s50 = sadd.s32 %s49, 1
      %p53 = scmp.eq.s32.totalorder %s15, 1
      %p54 = scmp.ne.s32.totalorder %s49, %s51
      %p55 = scmp.eq.s32.totalorder %s15, 0
      %p56 = por %p54, %p55
      %p57 = scmp.ne.s32.totalorder %s49, %s51
      %p58 = scmp.eq.s32.totalorder %s20, 1
      %p59 = por %p57, %p58
      %p60 = scmp.ne.s32.totalorder %s51, %s52
      %p61 = scmp.eq.s32.totalorder %s20, 0
      %p62 = por %p60, %p61
      %p63 = scmp.ne.s32.totalorder %s51, %s52
      %p64 = scmp.eq.s32.totalorder %s21, 1
      %p65 = por %p63, %p64
      %p67 = scmp.ne.s32.totalorder %s52, %s66
      %p68 = scmp.eq.s32.totalorder %s21, 0
      %p69 = por %p67, %p68
      %s71 = sadd.s32 %s70, 1
      %p74 = scmp.eq.s32.totalorder %s15, 1
      %p75 = scmp.ne.s32.totalorder %s70, %s72
      %p76 = scmp.eq.s32.totalorder %s15, 0
      %p77 = por %p75, %p76
      %p78 = scmp.ne.s32.totalorder %s70, %s72
      %p79 = scmp.eq.s32.totalorder %s20, 1
      %p80 = por %p78, %p79
      %p81 = scmp.ne.s32.totalorder %s72, %s73
      %p82 = scmp.eq.s32.totalorder %s20, 0
      %p83 = por %p81, %p82
      %p84 = scmp.ne.s32.totalorder %s72, %s73
      %p85 = scmp.eq.s32.totalorder %s21, 1
      %p86 = por %p84, %p85
      %p88 = scmp.ne.s32.totalorder %s73, %s87
      %p89 = scmp.eq.s32.totalorder %s21, 0
      %p90 = por %p88, %p89
      %s91 = ssub.s32 %s15, %s22
      %p92 = scmp.eq.s32.totalorder %s91, 0
      %s94 = sadd.s32 %s93, 1
      %s95 = scalar_select %p92, %s93, %s94
      %p98 = pneg %p92
      %p99 = scmp.eq.s32.totalorder %s15, 1
      %p100 = por %p98, %p99
      %p101 = scmp.ne.s32.totalorder %s93, %s96
      %p102 = scmp.eq.s32.totalorder %s15, 0
      %p103 = por %p101, %p102
      %p104 = scmp.ne.s32.totalorder %s93, %s96
      %p105 = scmp.eq.s32.totalorder %s20, 1
      %p106 = por %p104, %p105
      %p107 = scmp.ne.s32.totalorder %s96, %s97
      %p108 = scmp.eq.s32.totalorder %s20, 0
      %p109 = por %p107, %p108
      %p110 = scmp.ne.s32.totalorder %s96, %s97
      %p111 = scmp.eq.s32.totalorder %s21, 1
      %p112 = por %p110, %p111
      %p114 = scmp.ne.s32.totalorder %s97, %s113
      %p115 = scmp.eq.s32.totalorder %s21, 0
      %p116 = por %p114, %p115
      %p117 = scmp.le.s32.totalorder 1, %s15
      %p118 = scmp.lt.s32.totalorder %s15, 3
      %p119 = pnand %p117, %p118
      %p120 = pneg %p119
      // Predicated region
      $region9: #{tpu_custom_call.1} parent=5 // pred_check
        _
      $region10: #{tpu_custom_call.1} parent=5 // pred_check_branch
        %122 = sbr.rel (%p119) target = $region12
      $region11: #{tpu_custom_call.1} parent=5 // pred_region
        %s123 = ssub.s32 %s15, 1
        // Predicated region
        $region13: #{tpu_custom_call.1} parent=11 // pred_check
          %p124 = pneg %p62
        $region14: #{tpu_custom_call.1} parent=11 // pred_check_branch
          %126 = sbr.rel (%p124) target = $region16
        $region15: #{tpu_custom_call.1} parent=11 // pred_region
          _
        $region16: #{tpu_custom_call.1} parent=11 // pred_fallthru
          _
        // Predicated region
        $region17: #{tpu_custom_call.1} parent=11 // pred_check
          %p127 = pneg %p83
        $region18: #{tpu_custom_call.1} parent=11 // pred_check_branch
          %129 = sbr.rel (%p127) target = $region20
        $region19: #{tpu_custom_call.1} parent=11 // pred_region
          _
        $region20: #{tpu_custom_call.1} parent=11 // pred_fallthru
          _
      $region12: #{tpu_custom_call.1} parent=5 // pred_fallthru
        _
      %p130 = scmp.lt.s32.totalorder %s15, 2
      // Predicated region
      $region21: #{tpu_custom_call.1} parent=5 // pred_check
        %p131 = pneg %p130
      $region22: #{tpu_custom_call.1} parent=5 // pred_check_branch
        %133 = sbr.rel (%p131) target = $region24
      $region23: #{tpu_custom_call.1} parent=5 // pred_region
        // Predicated region
        $region25: #{tpu_custom_call.1} parent=23 // pred_check
          %p134 = pneg %p35
        $region26: #{tpu_custom_call.1} parent=23 // pred_check_branch
          %136 = sbr.rel (%p134) target = $region28
        $region27: #{tpu_custom_call.1} parent=23 // pred_region
          %s137 = sand.u32 %s25, 1
          %s138 = scalar_lea.sflag [#allocation3], %s137
          %s139 = sand.u32 %s25, 1
          %s140 = smul.addr %s139, 8
          %s141 = scalar_lea.vmem [#allocation2], %s140
          %s143 = ssub.s32 128, 128
          %144 = vsyncadd %s138, %s143
          %s145 = smul.addr %s15, 128
          %s146 = scalar_lea.hbm %s0, %s145
          %s148 = sshll.u32 %s141, 4
          %s149 = int_to_ptr.vmem [resolvable:$true] %s148
          %151 = dma.hbm_to_vmem [thread:$0]  %s146, 128, %s149, %s138
        $region28: #{tpu_custom_call.1} parent=23 // pred_fallthru
          _
      $region24: #{tpu_custom_call.1} parent=5 // pred_fallthru
        _
      %p152 = scmp.le.s32.totalorder 1, %s15
      %p153 = scmp.lt.s32.totalorder %s15, 3
      %p154 = pnand %p152, %p153
      %p155 = pneg %p154
      // Predicated region
      $region29: #{tpu_custom_call.1} parent=5 // pred_check
        _
      $region30: #{tpu_custom_call.1} parent=5 // pred_check_branch
        %157 = sbr.rel (%p154) target = $region32
      $region31: #{tpu_custom_call.1} parent=5 // pred_region
        %s158 = ssub.s32 %s15, 1
        %s159 = sand.u32 %s28, 1
        %s160 = scalar_lea.sflag [#allocation3], %s159
        %s161 = sand.u32 %s28, 1
        %s162 = smul.addr %s161, 8
        %s163 = scalar_lea.vmem [#allocation2], %s162
        // Predicated region
        $region33: #{tpu_custom_call.1} parent=31 // pred_check
          %p164 = pneg %p41
        $region34: #{tpu_custom_call.1} parent=31 // pred_check_branch
          %166 = sbr.rel (%p164) target = $region36
        $region35: #{tpu_custom_call.1} parent=31 // pred_region
          %167 = dma.done %s160, 128
        $region36: #{tpu_custom_call.1} parent=31 // pred_fallthru
          _
        %s168 = sand.u32 %s28, 1
        %s169 = scalar_lea.sflag [#allocation3], %s168
        %s170 = sand.u32 %s28, 1
        %s171 = smul.addr %s170, 8
        %s172 = scalar_lea.vmem [#allocation2], %s171
        %p173 = pneg %p41
        %p174 = pneg %p38
        %p175 = pneg %p62
        %p176 = pneg %p59
        %p177 = pneg %p83
        %p178 = pneg %p80
        %p179 = pneg %p109
        %p180 = pneg %p106
        %s181 = sand.u32 %s96, 1
        %s182 = scalar_lea.sflag [#allocation4], %s181
        %s183 = sand.u32 %s96, 1
        %s184 = smul.addr %s183, 8
        %s185 = scalar_lea.vmem [#allocation5], %s184
        %v186 = vld [vmem:[%s163] sm:$0xff]
        %vm187 = vcmask 261120
        %v189 = vsel %vm187, %v186, 0
        %191 = vmatprep.subr.mxu0 0.0
        %192 = vmatpush1.msra.mxu0 0.0
        %193 = vmatprep.subr.mxu0 0.0
        %194 = vmatpush1.msra.mxu0 0.0
        %195 = vmatprep.subr.mxu0 0.0
        %196 = vmatpush1.msra.mxu0 0.0
        %197 = vmatprep.subr.mxu0 0.0
        %198 = vmatpush1.msra.mxu0 0.0
        %199 = vmatprep.subr.mxu0 0.0
        %200 = vmatpush1.msra.mxu0 0.0
        %201 = vmatprep.subr.mxu0 0.0
        %202 = vmatpush1.msra.mxu0 0.0
        %203 = vmatprep.subr.mxu0 0.0
        %204 = vmatpush1.msra.mxu0 0.0
        %205 = vmatprep.subr.mxu0 0.0
        %206 = vmatpush1.msra.mxu0 0.0
        %207 = vmatprep.subr.mxu0 0.0
        %208 = vmatpush1.msra.mxu0 0.0
        %209 = vmatprep.subr.mxu0 0.0
        %210 = vmatpush1.msra.mxu0 0.0
        %211 = vmatprep.subr.mxu0 0.0
        %212 = vmatpush1.msra.mxu0 0.0
        %213 = vmatprep.subr.mxu0 0.0
        %214 = vmatpush1.msra.mxu0 0.0
        %215 = vmatprep.subr.mxu0 0.0
        %216 = vmatpush1.msra.mxu0 1.0
        %217 = vmatprep.subr.mxu0 0.0
        %218 = vmatpush1.msra.mxu0 1.0
        %219 = vmatprep.subr.mxu0 0.0
        %220 = vmatpush1.msra.mxu0 1.0
        %221 = vmatprep.subr.mxu0 0.0
        %222 = vmatpush1.msra.mxu0 1.0
        %223 = vmatprep.subr.mxu0 0.0
        %224 = vmatpush2.msra.mxu0 0.0
        %225 = vmatprep.subr.mxu0 0.0
        %226 = vmatpush2.msra.mxu0 0.0
        %227 = vmatprep.subr.mxu0 0.0
        %228 = vmatpush2.msra.mxu0 0.0
        %229 = vmatprep.subr.mxu0 0.0
        %230 = vmatpush2.msra.mxu0 0.0
        %231 = vmatprep.subr.mxu0 0.0
        %232 = vmatpush2.msra.mxu0 0.0
        %233 = vmatprep.subr.mxu0 0.0
        %234 = vmatpush2.msra.mxu0 0.0
        %235 = vmatprep.subr.mxu0 0.0
        %236 = vmatpush2.msra.mxu0 0.0
        %237 = vmatprep.subr.mxu0 0.0
        %238 = vmatpush2.msra.mxu0 0.0
        %239 = vmatprep.subr.mxu0 0.0
        %240 = vmatpush2.msra.mxu0 0.0
        %241 = vmatprep.subr.mxu0 0.0
        %242 = vmatpush2.msra.mxu0 0.0
        %243 = vmatprep.subr.mxu0 0.0
        %244 = vmatpush2.msra.mxu0 0.0
        %245 = vmatprep.subr.mxu0 0.0
        %246 = vmatpush2.msra.mxu0 0.0
        %247 = vmatprep.subr.mxu0 0.0
        %248 = vmatpush2.msra.mxu0 0.0
        %249 = vmatprep.subr.mxu0 0.0
        %250 = vmatpush2.msra.mxu0 0.0
        %251 = vmatprep.subr.mxu0 0.0
        %252 = vmatpush2.msra.mxu0 0.0
        %253 = vmatprep.subr.mxu0 0.0
        %254 = vmatpush2.msra.mxu0 0.0
        %255 = vmatprep.mubr.f32.mxu0 0.0
        %256 = vmatmul.mubr.f32.gmra.mxu0 %v189
        %v257 = vpop.f32.mrf.mxu0
        %v258 = vadd.f32 0.0, %v257
        %v259 = vpop.f32.mrf.mxu0
        %260 = vdwg.mxu0
        %v261 = vmul.f32 %v258, 0.03125
        %263 = vset.pattern.permute.xlu0 0
        %264 = vperm.xlu0 %263, %v261
        %v265 = vpop.permute.xlu0 %264
        %v267 = vsub.f32 %v186, %v265
        %v268 = vmul.f32 %v267, %v267
        %v270 = vsel %vm187, %v268, 0
        %272 = vmatprep.subr.mxu0 0.0
        %273 = vmatpush1.msra.mxu0 0.0
        %274 = vmatprep.subr.mxu0 0.0
        %275 = vmatpush1.msra.mxu0 0.0
        %276 = vmatprep.subr.mxu0 0.0
        %277 = vmatpush1.msra.mxu0 0.0
        %278 = vmatprep.subr.mxu0 0.0
        %279 = vmatpush1.msra.mxu0 0.0
        %280 = vmatprep.subr.mxu0 0.0
        %281 = vmatpush1.msra.mxu0 0.0
        %282 = vmatprep.subr.mxu0 0.0
        %283 = vmatpush1.msra.mxu0 0.0
        %284 = vmatprep.subr.mxu0 0.0
        %285 = vmatpush1.msra.mxu0 0.0
        %286 = vmatprep.subr.mxu0 0.0
        %287 = vmatpush1.msra.mxu0 0.0
        %288 = vmatprep.subr.mxu0 0.0
        %289 = vmatpush1.msra.mxu0 0.0
        %290 = vmatprep.subr.mxu0 0.0
        %291 = vmatpush1.msra.mxu0 0.0
        %292 = vmatprep.subr.mxu0 0.0
        %293 = vmatpush1.msra.mxu0 0.0
        %294 = vmatprep.subr.mxu0 0.0
        %295 = vmatpush1.msra.mxu0 0.0
        %296 = vmatprep.subr.mxu0 0.0
        %297 = vmatpush1.msra.mxu0 1.0
        %298 = vmatprep.subr.mxu0 0.0
        %299 = vmatpush1.msra.mxu0 1.0
        %300 = vmatprep.subr.mxu0 0.0
        %301 = vmatpush1.msra.mxu0 1.0
        %302 = vmatprep.subr.mxu0 0.0
        %303 = vmatpush1.msra.mxu0 1.0
        %304 = vmatprep.subr.mxu0 0.0
        %305 = vmatpush2.msra.mxu0 0.0
        %306 = vmatprep.subr.mxu0 0.0
        %307 = vmatpush2.msra.mxu0 0.0
        %308 = vmatprep.subr.mxu0 0.0
        %309 = vmatpush2.msra.mxu0 0.0
        %310 = vmatprep.subr.mxu0 0.0
        %311 = vmatpush2.msra.mxu0 0.0
        %312 = vmatprep.subr.mxu0 0.0
        %313 = vmatpush2.msra.mxu0 0.0
        %314 = vmatprep.subr.mxu0 0.0
        %315 = vmatpush2.msra.mxu0 0.0
        %316 = vmatprep.subr.mxu0 0.0
        %317 = vmatpush2.msra.mxu0 0.0
        %318 = vmatprep.subr.mxu0 0.0
        %319 = vmatpush2.msra.mxu0 0.0
        %320 = vmatprep.subr.mxu0 0.0
        %321 = vmatpush2.msra.mxu0 0.0
        %322 = vmatprep.subr.mxu0 0.0
        %323 = vmatpush2.msra.mxu0 0.0
        %324 = vmatprep.subr.mxu0 0.0
        %325 = vmatpush2.msra.mxu0 0.0
        %326 = vmatprep.subr.mxu0 0.0
        %327 = vmatpush2.msra.mxu0 0.0
        %328 = vmatprep.subr.mxu0 0.0
        %329 = vmatpush2.msra.mxu0 0.0
        %330 = vmatprep.subr.mxu0 0.0
        %331 = vmatpush2.msra.mxu0 0.0
        %332 = vmatprep.subr.mxu0 0.0
        %333 = vmatpush2.msra.mxu0 0.0
        %334 = vmatprep.subr.mxu0 0.0
        %335 = vmatpush2.msra.mxu0 0.0
        %336 = vmatprep.mubr.f32.mxu0 0.0
        %337 = vmatmul.mubr.f32.gmra.mxu0 %v270
        %v338 = vpop.f32.mrf.mxu0
        %v339 = vadd.f32 0.0, %v338
        %v340 = vpop.f32.mrf.mxu0
        %341 = vdwg.mxu0
        %v342 = vmul.f32 %v339, 0.03125
        %v343 = vadd.f32 %v342, 1e-12
        %v344 = vrsqrt.pop %v343
        %346 = vset.pattern.permute.xlu0 0
        %347 = vperm.xlu0 %346, %v344
        %v348 = vpop.permute.xlu0 %347
        %v350 = vmul.f32 %v267, %v348
        %v351 = vld [vmem:[%s1] sm:$0x1]
        %v353 = vlaneseq
        %v354 = vshrl.u32 %v353, 7
        %v355 = vsub.s32 0, %v354
        %v356 = vrot.slane %v351, %v355
        %v358 = vmul.f32 %v356, %v350
        %v359 = vld [vmem:[%s2] sm:$0x1]
        %v361 = vlaneseq
        %v362 = vshrl.u32 %v361, 7
        %v363 = vsub.s32 0, %v362
        %v364 = vrot.slane %v359, %v363
        %v366 = vadd.f32 %v358, %v364
        %367 = vst.msk [vmem:[%s185] sm:$0xff] %vm187, %v366
        %s368 = sand.u32 %s96, 1
        %s369 = scalar_lea.sflag [#allocation4], %s368
        %s370 = sand.u32 %s96, 1
        %s371 = smul.addr %s370, 8
        %s372 = scalar_lea.vmem [#allocation5], %s371
        // Predicated region
        $region37: #{tpu_custom_call.1} parent=31 // pred_check
          %p373 = pneg %p106
        $region38: #{tpu_custom_call.1} parent=31 // pred_check_branch
          %375 = sbr.rel (%p373) target = $region40
        $region39: #{tpu_custom_call.1} parent=31 // pred_region
          %s377 = ssub.s32 128, 128
          %378 = vsyncadd %s369, %s377
          %s379 = smul.addr %s20, 128
          %s380 = scalar_lea.hbm %s3, %s379
          %s382 = sshll.u32 %s372, 4
          %s383 = int_to_ptr.vmem [resolvable:$true] %s382
          %385 = dma.vmem_to_hbm [thread:$0]  %s383, 128, %s380, %s369
        $region40: #{tpu_custom_call.1} parent=31 // pred_fallthru
          _
      $region32: #{tpu_custom_call.1} parent=5 // pred_fallthru
        _
      %p386 = scmp.le.s32.totalorder 2, %s15
      // Predicated region
      $region41: #{tpu_custom_call.1} parent=5 // pred_check
        %p387 = pneg %p386
      $region42: #{tpu_custom_call.1} parent=5 // pred_check_branch
        %389 = sbr.rel (%p387) target = $region44
      $region43: #{tpu_custom_call.1} parent=5 // pred_region
        %s390 = ssub.s32 %s15, 2
        // Predicated region
        $region45: #{tpu_custom_call.1} parent=43 // pred_check
          %p391 = pneg %p112
        $region46: #{tpu_custom_call.1} parent=43 // pred_check_branch
          %393 = sbr.rel (%p391) target = $region48
        $region47: #{tpu_custom_call.1} parent=43 // pred_region
          %s394 = sand.u32 %s97, 1
          %s395 = scalar_lea.sflag [#allocation4], %s394
          %s396 = sand.u32 %s97, 1
          %s397 = smul.addr %s396, 8
          %s398 = scalar_lea.vmem [#allocation5], %s397
          %399 = dma.done %s395, 128
        $region48: #{tpu_custom_call.1} parent=43 // pred_fallthru
          _
      $region44: #{tpu_custom_call.1} parent=5 // pred_fallthru
        _
    $region6: #{tpu_custom_call.1} parent=1 // loop_footer
      %s19 = sadd.s32 1, %s15
    $region7: #{tpu_custom_call.1} parent=1 // loop_footer_branch
      %14 = sbr.rel target = $region3
    $region8: #{tpu_custom_call.1} parent=1 // loop_exit
      _
    %400 = vsyncpa [#allocation3], 1
    %s401 = scalar_lea.sflag [#allocation3], 1
    %402 = vsyncpa %s401, 1
    %403 = vsyncpa [#allocation4], 1
    %s404 = scalar_lea.sflag [#allocation4], 1
    %405 = vsyncpa %s404, 1

</llo_original>
